<compile_context>
chip_gen: v5e
topology: v5e:2x2
jax: 0.10.0
libtpu: 0.0.40
codegen_flags: <defaults>
</compile_context>

<pallas_src>
import functools

import jax
import jax.numpy as jnp
from jax import lax
from jax.experimental import pallas as pl
from jax.experimental.pallas import tpu as pltpu


def _layernorm_kernel(x_ref, w_ref, b_ref, o_ref, *, bias_free, eps):
    # x_ref / o_ref: (1, C, Lt)   w_ref / b_ref: (C, 1)
    x = x_ref[0].astype(jnp.float32)                       # (C, Lt)
    inv_c = 1.0 / x.shape[0]
    w = w_ref[...].astype(jnp.float32)                     # (C, 1) lane-broadcast

    if bias_free:
        # Single sweep: sum and sum-of-squares together; var = E[x^2] - mu^2
        # (clamped at 0 to guard against cancellation), f32 accumulation.
        s1 = jnp.sum(x, axis=0, keepdims=True)             # (1, Lt)
        s2 = jnp.sum(x * x, axis=0, keepdims=True)         # (1, Lt)
        mu = s1 * inv_c
        var = jnp.maximum(s2 * inv_c - mu * mu, 0.0)       # biased variance
        inv = lax.rsqrt(var + eps)                         # EUP
        y = x * (inv * w)
    else:
        # Two-pass (numerically safer); d is needed for the output anyway.
        mu = jnp.sum(x, axis=0, keepdims=True) * inv_c     # (1, Lt)
        d = x - mu
        var = jnp.sum(d * d, axis=0, keepdims=True) * inv_c
        inv = lax.rsqrt(var + eps)                         # EUP
        y = d * (inv * w) + b_ref[...].astype(jnp.float32)

    o_ref[0] = y.astype(o_ref.dtype)


def _round_up(v, m):
    return ((v + m - 1) // m) * m


def _tpu_vmem_capacity_bytes():
    """Physical per-core VMEM, with a conservative fallback (v7x: 64 MiB)."""
    try:
        info = pltpu.get_tpu_info()
        cap = int(getattr(info, "vmem_capacity_bytes", 0))
        if cap > 0:
            return cap
    except Exception:
        pass
    return 64 << 20


def _plan_tiling(L, C, dtype, B):
    """Pick the lane tile Lt and an explicit VMEM limit for the pipeline."""
    itemsize = jnp.dtype(dtype).itemsize
    sub = 8 * max(1, 4 // itemsize)          # sublane multiple: 8 f32 / 16 bf16 / 32 i8
    c_pad = _round_up(C, sub)                # padded C of the DMA'd block (input dtype)
    c_pad_f32 = _round_up(C, 8)              # padded C of the in-kernel f32 temporaries

    vmem_phys = _tpu_vmem_capacity_bytes()
    # Generation-aware block cap: larger tiles when physical VMEM is plentiful
    # (v5e/v6e: 128 MiB), a bit smaller on v7x (64 MiB per TC).
    cap_bytes = (6 << 20) if vmem_phys >= (96 << 20) else (4 << 20)
    cap_lanes = max(128, cap_bytes // (itemsize * c_pad))

    if L <= 128:
        lt = L                               # full-dim block (always legal)
    elif L <= cap_lanes:
        lt = L                               # whole spatial axis in one block
    else:
        lt = max(128, (cap_lanes // 128) * 128)   # lane-dense multiple of 128

    # v7x has 2 TensorCores: make sure the parallel grid has >= 2 total steps.
    if B == 1 and lt >= L and L > 128:
        half = _round_up(-(-L // 2), 128)
        if half < L:
            lt = half

    # Explicit VMEM budget: double-buffered in + out blocks, ~3 f32 (C, Lt)
    # temporaries, resident weight/bias, plus slack.
    lt_pad = _round_up(lt, 128)
    blk_io = c_pad * lt_pad * itemsize
    blk_f32 = c_pad_f32 * lt_pad * 4
    params = 2 * c_pad_f32 * 128 * 4
    limit = 4 * blk_io + 3 * blk_f32 + params + (2 << 20)
    limit = max(limit, 32 << 20)
    limit = min(limit, int(vmem_phys * 0.75))
    return lt, int(limit)


def layer_norm(x, weight, bias=None, layer_norm_type="WithBias", eps=1e-5):
    """Equivalent of LayerNorm(dim, LayerNorm_type).forward(x) for NCHW x."""
    B, C, H, W = x.shape
    L = H * W
    x3 = x.reshape(B, C, L)                 # free: merges trailing dims, no transpose

    Lt, vmem_limit = _plan_tiling(L, C, x.dtype, B)
    grid = (B, pl.cdiv(L, Lt))              # tail block (if any) is masked by Pallas

    bias_free = (layer_norm_type == "BiasFree")
    w2 = weight.reshape(C, 1).astype(jnp.float32)
    if bias is None:
        b2 = jnp.zeros((C, 1), jnp.float32)
    else:
        b2 = bias.reshape(C, 1).astype(jnp.float32)

    kernel = functools.partial(_layernorm_kernel, bias_free=bias_free, eps=eps)

    out = pl.pallas_call(
        kernel,
        out_shape=jax.ShapeDtypeStruct((B, C, L), x.dtype),
        grid=grid,
        in_specs=[
            pl.BlockSpec((1, C, Lt), lambda b, l: (b, 0, l)),
            pl.BlockSpec((C, 1), lambda b, l: (0, 0)),   # resident constant
            pl.BlockSpec((C, 1), lambda b, l: (0, 0)),   # resident constant
        ],
        out_specs=pl.BlockSpec((1, C, Lt), lambda b, l: (b, 0, l)),
        compiler_params=pltpu.CompilerParams(
            dimension_semantics=("parallel", "parallel"),
            vmem_limit_bytes=vmem_limit),
    )(x3, w2, b2)
    return out.reshape(B, C, H, W)


def layer_norm_ref(x, weight, bias=None, layer_norm_type="WithBias", eps=1e-5):
    """Pure-JAX reference mirroring to_4d(body(to_3d(x)), h, w)."""
    B, C, H, W = x.shape
    xt = x.astype(jnp.float32)
    mu = jnp.mean(xt, axis=1, keepdims=True)
    var = jnp.mean((xt - mu) ** 2, axis=1, keepdims=True)
    w = weight.reshape(1, C, 1, 1).astype(jnp.float32)
    if layer_norm_type == "BiasFree":
        y = xt / jnp.sqrt(var + eps) * w
    else:
        b = bias.reshape(1, C, 1, 1).astype(jnp.float32)
        y = (xt - mu) / jnp.sqrt(var + eps) * w + b
    return y.astype(x.dtype)


if __name__ == "__main__":
    key = jax.random.PRNGKey(0)
    kx, kw, kb = jax.random.split(key, 3)
    B, C, H, W = 2, 4, 16, 16
    x = jax.random.normal(kx, (B, C, H, W), dtype=jnp.float32)
    weight = 1.0 + 0.1 * jax.random.normal(kw, (C,), dtype=jnp.float32)
    bias = 0.1 * jax.random.normal(kb, (C,), dtype=jnp.float32)

    ln_withbias = jax.jit(
        functools.partial(layer_norm, layer_norm_type="WithBias"))
    ln_biasfree = jax.jit(
        functools.partial(layer_norm, layer_norm_type="BiasFree"))

    out_wb = jax.block_until_ready(ln_withbias(x, weight, bias))
    out_bf = jax.block_until_ready(ln_biasfree(x, weight, None))

    ref_wb = layer_norm_ref(x, weight, bias, "WithBias")
    ref_bf = layer_norm_ref(x, weight, None, "BiasFree")

    assert out_wb.shape == (B, C, H, W) and out_wb.dtype == x.dtype
    assert out_bf.shape == (B, C, H, W) and out_bf.dtype == x.dtype
    assert jnp.allclose(out_wb, ref_wb, rtol=1e-5, atol=1e-5), "WithBias mismatch"
    assert jnp.allclose(out_bf, ref_bf, rtol=1e-5, atol=1e-5), "BiasFree mismatch"
    print("KERNEL_OK")
</pallas_src>

<mosaic_0001>
module attributes {stable_mosaic.version = 11 : i64} {
  func.func @_layernorm_kernel(%arg0: i32, %arg1: i32, %arg2: memref<1x4x256xf32, #tpu.memory_space<vmem>>, %arg3: memref<4x1xf32, #tpu.memory_space<vmem>>, %arg4: memref<4x1xf32, #tpu.memory_space<vmem>>, %arg5: memref<1x4x256xf32, #tpu.memory_space<vmem>>) attributes {dimension_semantics = [#tpu.dimension_semantics<parallel>, #tpu.dimension_semantics<parallel>], iteration_bounds = array<i64: 2, 1>, scalar_prefetch = 0 : i64, scratch_operands = 0 : i64, tpu.core_type = #tpu.core_type<tc>, window_params = [{transform_indices = @transform_0, window_bounds = array<i64: 1, 4, 256>}, {pipeline_mode = #tpu.pipeline_mode<synchronous>, transform_indices = @transform_1, window_bounds = array<i64: 4, 1>}, {pipeline_mode = #tpu.pipeline_mode<synchronous>, transform_indices = @transform_2, window_bounds = array<i64: 4, 1>}, {transform_indices = @transform_3, window_bounds = array<i64: 1, 4, 256>}]} {
    %c0 = arith.constant 0 : index
    %c0_0 = arith.constant 0 : index
    %c0_1 = arith.constant 0 : index
    %0 = vector.load %arg2[%c0, %c0_0, %c0_1] : memref<1x4x256xf32, #tpu.memory_space<vmem>>, vector<1x4x256xf32>
    %1 = vector.shape_cast %0 : vector<1x4x256xf32> to vector<4x256xf32>
    %c0_2 = arith.constant 0 : index
    %c0_3 = arith.constant 0 : index
    %2 = vector.load %arg3[%c0_2, %c0_3] : memref<4x1xf32, #tpu.memory_space<vmem>>, vector<4x1xf32>
    %cst = arith.constant dense<0.000000e+00> : vector<256xf32>
    %3 = vector.multi_reduction <add>, %1, %cst [0] : vector<4x256xf32> to vector<256xf32>
    %4 = vector.shape_cast %3 : vector<256xf32> to vector<1x256xf32>
    %cst_4 = arith.constant 2.500000e-01 : f32
    %5 = vector.broadcast %cst_4 : f32 to vector<1x256xf32>
    %6 = arith.mulf %4, %5 : vector<1x256xf32>
    %7 = vector.broadcast %6 : vector<1x256xf32> to vector<4x256xf32>
    %8 = arith.subf %1, %7 : vector<4x256xf32>
    %9 = arith.mulf %8, %8 : vector<4x256xf32>
    %cst_5 = arith.constant dense<0.000000e+00> : vector<256xf32>
    %10 = vector.multi_reduction <add>, %9, %cst_5 [0] : vector<4x256xf32> to vector<256xf32>
    %11 = vector.shape_cast %10 : vector<256xf32> to vector<1x256xf32>
    %cst_6 = arith.constant 2.500000e-01 : f32
    %12 = vector.broadcast %cst_6 : f32 to vector<1x256xf32>
    %13 = arith.mulf %11, %12 : vector<1x256xf32>
    %cst_7 = arith.constant 9.99999974E-6 : f32
    %14 = vector.broadcast %cst_7 : f32 to vector<1x256xf32>
    %15 = arith.addf %13, %14 : vector<1x256xf32>
    %16 = math.rsqrt %15 : vector<1x256xf32>
    %17 = vector.broadcast %16 : vector<1x256xf32> to vector<4x256xf32>
    %18 = vector.broadcast %2 : vector<4x1xf32> to vector<4x256xf32>
    %19 = arith.mulf %17, %18 : vector<4x256xf32>
    %20 = arith.mulf %8, %19 : vector<4x256xf32>
    %c0_8 = arith.constant 0 : index
    %c0_9 = arith.constant 0 : index
    %21 = vector.load %arg4[%c0_8, %c0_9] : memref<4x1xf32, #tpu.memory_space<vmem>>, vector<4x1xf32>
    %22 = vector.broadcast %21 : vector<4x1xf32> to vector<4x256xf32>
    %23 = arith.addf %20, %22 : vector<4x256xf32>
    %c0_10 = arith.constant 0 : index
    %c0_11 = arith.constant 0 : index
    %c0_12 = arith.constant 0 : index
    %24 = vector.load %arg5[%c0_10, %c0_11, %c0_12] : memref<1x4x256xf32, #tpu.memory_space<vmem>>, vector<1x4x256xf32>
    %25 = vector.shape_cast %24 : vector<1x4x256xf32> to vector<4x256xf32>
    %26 = vector.shape_cast %23 : vector<4x256xf32> to vector<1x4x256xf32>
    tpu.vector_store %arg5[%c0_10, %c0_11, %c0_12], %26 {strides = array<i32>} : memref<1x4x256xf32, #tpu.memory_space<vmem>>, vector<1x4x256xf32>,
    return
  }
  func.func @transform_0(%arg0: i32, %arg1: i32) -> (i32, i32, i32) {
    %c0_i32 = arith.constant 0 : i32
    %c0_i32_0 = arith.constant 0 : i32
    return %arg0, %c0_i32, %arg1 : i32, i32, i32
  }
  func.func @transform_1(%arg0: i32, %arg1: i32) -> (i32, i32) {
    %c0_i32 = arith.constant 0 : i32
    %c0_i32_0 = arith.constant 0 : i32
    %c0_i32_1 = arith.constant 0 : i32
    return %c0_i32, %c0_i32_0 : i32, i32
  }
  func.func @transform_2(%arg0: i32, %arg1: i32) -> (i32, i32) {
    %c0_i32 = arith.constant 0 : i32
    %c0_i32_0 = arith.constant 0 : i32
    %c0_i32_1 = arith.constant 0 : i32
    return %c0_i32, %c0_i32_0 : i32, i32
  }
  func.func @transform_3(%arg0: i32, %arg1: i32) -> (i32, i32, i32) {
    %c0_i32 = arith.constant 0 : i32
    %c0_i32_0 = arith.constant 0 : i32
    return %arg0, %c0_i32, %arg1 : i32, i32, i32
  }
}

</mosaic_0001>

<llo_original>
// kernel: layer_norm.1
$region0: #{layer_norm.1}
  #allocation0 [shape = 'u32[]', space=smem, size = 0x4, offset = 0x4, fixed_abs, tag = 'smem constant byte address 0x4 - core index']
  #allocation1 [shape = 'u32[72,128]{1,0:T(1,128)}', space=vmem, size = 0x9000, scoped, tag = 'internal scratch']
  %s0 = inlined_call_operand.vmem [shape: f32[2,4,256], index: 0, kind: input, shape index: {}]
  %s1 = inlined_call_operand.vmem [shape: f32[4,1], index: 1, kind: input, shape index: {}]
  %s2 = inlined_call_operand.vmem [shape: f32[4,1], index: 2, kind: input, shape index: {}]
  %s3 = inlined_call_operand.vmem [shape: f32[2,4,256], index: 3, kind: output, shape index: {}]
  %s4 = sld [smem:[#allocation0]]
  $region45: #{layer_norm.1} parent=0
    _
  %s6 = ssub.s32 1, %s4
  %s7 = scalar_select 0, %s6, %s4
  loop: start=0, step=1, limit=4
  $region2: #{layer_norm.1} parent=0 // loop_pre_header
    _
  $region3: #{layer_norm.1} parent=0 // loop_header
    %s9 = sphi 0, %s13
    %p10 = scmp.ge.s32.totalorder %s9, 4
    %s16 = sphi 0, %s28
    %s17 = sphi 0, %s24
    %s18 = sphi 0, %s16
    %s19 = sphi 0, %s17
    %s20 = sphi 0, %s18
    %s21 = sphi 0, %s19
    %s33 = sphi 0, %s35
    %s36 = sphi 0, %s33
    %s37 = sphi 0, %s36
    %s53 = sphi 0, %s37
    %s57 = sphi 0, %s57
    %s59 = sphi 0, %s57
    %s60 = sphi 0, %s59
    %s74 = sphi 0, %s60
    %s78 = sphi 0, %s78
    %s80 = sphi 0, %s78
    %s81 = sphi 0, %s80
    %s95 = sphi 0, %s81
    %s103 = sphi 0, %s105
    %s106 = sphi 0, %s103
    %s107 = sphi 0, %s106
    %s123 = sphi 0, %s107
  $region4: #{layer_norm.1} parent=0 // loop_header_branch
    %12 = sbr.rel (%p10) target = $region8
  $region5: #{layer_norm.1} parent=0 // loop_body
    %s14 = ssub.s32 %s9, 1
    %s15 = ssub.s32 %s9, 2
    %s22 = sadd.s32 1, %s17
    %p23 = scmp.ge.s32.totalorder %s22, 1
    %s24 = scalar_select %p23, 0, %s22
    %s25 = sadd.s32 1, %s16
    %s26 = scalar_select %p23, %s25, %s16
    %p27 = scmp.ge.s32.totalorder %s26, 2
    %s28 = scalar_select %p27, 0, %s26
    %s29 = ssub.s32 %s16, %s28
    %s30 = ssub.s32 %s17, %s24
    %s31 = sor.u32 %s29, %s30
    %p32 = scmp.eq.s32.totalorder %s31, 0
    %s34 = sadd.s32 %s33, 1
    %s35 = scalar_select %p32, %s33, %s34
    %p38 = pneg %p32
    %p39 = scmp.eq.s32.totalorder %s9, 1
    %p40 = por %p38, %p39
    %p41 = scmp.ne.s32.totalorder %s33, %s36
    %p42 = scmp.eq.s32.totalorder %s9, 0
    %p43 = por %p41, %p42
    %p44 = scmp.ne.s32.totalorder %s33, %s36
    %p45 = scmp.eq.s32.totalorder %s14, 1
    %p46 = por %p44, %p45
    %p47 = scmp.ne.s32.totalorder %s36, %s37
    %p48 = scmp.eq.s32.totalorder %s14, 0
    %p49 = por %p47, %p48
    %p50 = scmp.ne.s32.totalorder %s36, %s37
    %p51 = scmp.eq.s32.totalorder %s15, 1
    %p52 = por %p50, %p51
    %p54 = scmp.ne.s32.totalorder %s37, %s53
    %p55 = scmp.eq.s32.totalorder %s15, 0
    %p56 = por %p54, %p55
    %s58 = sadd.s32 %s57, 1
    %p61 = scmp.eq.s32.totalorder %s9, 1
    %p62 = scmp.ne.s32.totalorder %s57, %s59
    %p63 = scmp.eq.s32.totalorder %s9, 0
    %p64 = por %p62, %p63
    %p65 = scmp.ne.s32.totalorder %s57, %s59
    %p66 = scmp.eq.s32.totalorder %s14, 1
    %p67 = por %p65, %p66
    %p68 = scmp.ne.s32.totalorder %s59, %s60
    %p69 = scmp.eq.s32.totalorder %s14, 0
    %p70 = por %p68, %p69
    %p71 = scmp.ne.s32.totalorder %s59, %s60
    %p72 = scmp.eq.s32.totalorder %s15, 1
    %p73 = por %p71, %p72
    %p75 = scmp.ne.s32.totalorder %s60, %s74
    %p76 = scmp.eq.s32.totalorder %s15, 0
    %p77 = por %p75, %p76
    %s79 = sadd.s32 %s78, 1
    %p82 = scmp.eq.s32.totalorder %s9, 1
    %p83 = scmp.ne.s32.totalorder %s78, %s80
    %p84 = scmp.eq.s32.totalorder %s9, 0
    %p85 = por %p83, %p84
    %p86 = scmp.ne.s32.totalorder %s78, %s80
    %p87 = scmp.eq.s32.totalorder %s14, 1
    %p88 = por %p86, %p87
    %p89 = scmp.ne.s32.totalorder %s80, %s81
    %p90 = scmp.eq.s32.totalorder %s14, 0
    %p91 = por %p89, %p90
    %p92 = scmp.ne.s32.totalorder %s80, %s81
    %p93 = scmp.eq.s32.totalorder %s15, 1
    %p94 = por %p92, %p93
    %p96 = scmp.ne.s32.totalorder %s81, %s95
    %p97 = scmp.eq.s32.totalorder %s15, 0
    %p98 = por %p96, %p97
    %s99 = ssub.s32 %s16, %s28
    %s100 = ssub.s32 %s17, %s24
    %s101 = sor.u32 %s99, %s100
    %p102 = scmp.eq.s32.totalorder %s101, 0
    %s104 = sadd.s32 %s103, 1
    %s105 = scalar_select %p102, %s103, %s104
    %p108 = pneg %p102
    %p109 = scmp.eq.s32.totalorder %s9, 1
    %p110 = por %p108, %p109
    %p111 = scmp.ne.s32.totalorder %s103, %s106
    %p112 = scmp.eq.s32.totalorder %s9, 0
    %p113 = por %p111, %p112
    %p114 = scmp.ne.s32.totalorder %s103, %s106
    %p115 = scmp.eq.s32.totalorder %s14, 1
    %p116 = por %p114, %p115
    %p117 = scmp.ne.s32.totalorder %s106, %s107
    %p118 = scmp.eq.s32.totalorder %s14, 0
    %p119 = por %p117, %p118
    %p120 = scmp.ne.s32.totalorder %s106, %s107
    %p121 = scmp.eq.s32.totalorder %s15, 1
    %p122 = por %p120, %p121
    %p124 = scmp.ne.s32.totalorder %s107, %s123
    %p125 = scmp.eq.s32.totalorder %s15, 0
    %p126 = por %p124, %p125
    %p127 = scmp.le.s32.totalorder 1, %s9
    %p128 = scmp.lt.s32.totalorder %s9, 3
    %p129 = pnand %p127, %p128
    %p130 = pneg %p129
    // Predicated region
    $region9: #{layer_norm.1} parent=5 // pred_check
      _
    $region10: #{layer_norm.1} parent=5 // pred_check_branch
      %132 = sbr.rel (%p129) target = $region12
    $region11: #{layer_norm.1} parent=5 // pred_region
      %s133 = ssub.s32 %s9, 1
      // Predicated region
      $region13: #{layer_norm.1} parent=11 // pred_check
        %p134 = pneg %p70
      $region14: #{layer_norm.1} parent=11 // pred_check_branch
        %136 = sbr.rel (%p134) target = $region16
      $region15: #{layer_norm.1} parent=11 // pred_region
        _
      $region16: #{layer_norm.1} parent=11 // pred_fallthru
        _
      // Predicated region
      $region17: #{layer_norm.1} parent=11 // pred_check
        %p137 = pneg %p91
      $region18: #{layer_norm.1} parent=11 // pred_check_branch
        %139 = sbr.rel (%p137) target = $region20
      $region19: #{layer_norm.1} parent=11 // pred_region
        _
      $region20: #{layer_norm.1} parent=11 // pred_fallthru
        _
    $region12: #{layer_norm.1} parent=5 // pred_fallthru
      _
    %p140 = scmp.lt.s32.totalorder %s9, 2
    // Predicated region
    $region21: #{layer_norm.1} parent=5 // pred_check
      %p141 = pneg %p140
    $region22: #{layer_norm.1} parent=5 // pred_check_branch
      %143 = sbr.rel (%p141) target = $region24
    $region23: #{layer_norm.1} parent=5 // pred_region
      // Predicated region
      $region25: #{layer_norm.1} parent=23 // pred_check
        %p144 = pneg %p43
      $region26: #{layer_norm.1} parent=23 // pred_check_branch
        %146 = sbr.rel (%p144) target = $region28
      $region27: #{layer_norm.1} parent=23 // pred_region
        %s147 = smul.u32 2, %s17
        %p148 = scmp.lt.s32.totalorder %s16, 1
        %s149 = scalar_select %p148, %s16, 1
        %p150 = scmp.lt.s32.totalorder %s147, 1
        %s151 = scalar_select %p150, %s147, 1
        %s152 = smul.addr %s149, 2
        %s153 = sadd.s32 %s151, %s152
        %s154 = smul.addr %s153, 4
        %s155 = scalar_lea.vmem %s0, %s154
        %s156 = smul.u32 2, %s17
      $region28: #{layer_norm.1} parent=23 // pred_fallthru
        _
    $region24: #{layer_norm.1} parent=5 // pred_fallthru
      _
    %p157 = scmp.le.s32.totalorder 1, %s9
    %p158 = scmp.lt.s32.totalorder %s9, 3
    %p159 = pnand %p157, %p158
    %p160 = pneg %p159
    // Predicated region
    $region29: #{layer_norm.1} parent=5 // pred_check
      _
    $region30: #{layer_norm.1} parent=5 // pred_check_branch
      %162 = sbr.rel (%p159) target = $region32
    $region31: #{layer_norm.1} parent=5 // pred_region
      %s163 = ssub.s32 %s9, 1
      %s164 = smul.u32 2, %s19
      %p165 = scmp.lt.s32.totalorder %s18, 1
      %s166 = scalar_select %p165, %s18, 1
      %p167 = scmp.lt.s32.totalorder %s164, 1
      %s168 = scalar_select %p167, %s164, 1
      %s169 = smul.addr %s166, 2
      %s170 = sadd.s32 %s168, %s169
      %s171 = smul.addr %s170, 4
      %s172 = scalar_lea.vmem %s0, %s171
      %p173 = pneg %p49
      %p174 = pneg %p46
      %p175 = pneg %p70
      %p176 = pneg %p67
      %p177 = pneg %p91
      %p178 = pneg %p88
      %p179 = pneg %p119
      %p180 = pneg %p116
      %s181 = smul.u32 2, %s19
      %p182 = scmp.lt.s32.totalorder %s18, 1
      %s183 = scalar_select %p182, %s18, 1
      %p184 = scmp.lt.s32.totalorder %s181, 1
      %s185 = scalar_select %p184, %s181, 1
      %s186 = smul.addr %s183, 2
      %s187 = sadd.s32 %s185, %s186
      %s188 = smul.addr %s187, 4
      %s189 = scalar_lea.vmem %s3, %s188
      %s190 = smul.u32 2, %s19
      %p191 = scmp.lt.s32.totalorder %s18, 1
      %s192 = scalar_select %p191, %s18, 1
      %p193 = scmp.lt.s32.totalorder %s190, 1
      %s194 = scalar_select %p193, %s190, 1
      %s195 = smul.addr %s192, 2
      %s196 = sadd.s32 %s194, %s195
      %s197 = smul.addr %s196, 4
      %s198 = scalar_lea.vmem %s0, %s197
      %s199 = smul.u32 2, %s19
      %s200 = smul.u32 2, %s19
      %p201 = scmp.lt.s32.totalorder %s18, 1
      %s202 = scalar_select %p201, %s18, 1
      %p203 = scmp.lt.s32.totalorder %s200, 1
      %s204 = scalar_select %p203, %s200, 1
      %s205 = smul.addr %s202, 2
      %s206 = sadd.s32 %s204, %s205
      %s207 = smul.addr %s206, 4
      %s208 = scalar_lea.vmem %s3, %s207
      %s209 = smul.u32 2, %s19
      %v210 = vld [vmem:[%s198] sm:$0xff]
      %v211 = vld [vmem:[%s1] sm:$0xf]
      %213 = vst [vmem:[#allocation1] ss:$2 sm:$0xff] %v210
      %v214 = vld.sshfl [vmem:[#allocation1] sm:$0xff pattern:$0x75316420]
      %v215 = vld.sshfl [vmem:[#allocation1 + $0x8] sm:$0xff pattern:$0x75316420]
      %vm218 = vcmask 1043456
      %v219 = vsel %vm218, %v214, 0.0
      %v220 = vrot.slane %v219, 4
      %v221 = vadd.f32 %v219, %v220
      %v222 = vrot.slane %v221, 2
      %v223 = vadd.f32 %v221, %v222
      %v224 = vrot.slane %v223, 1
      %v225 = vadd.f32 %v223, %v224
      %v226 = vsel %vm218, %v215, 0.0
      %v227 = vrot.slane %v226, 4
      %v228 = vadd.f32 %v226, %v227
      %v229 = vrot.slane %v228, 2
      %v230 = vadd.f32 %v228, %v229
      %v231 = vrot.slane %v230, 1
      %v232 = vadd.f32 %v230, %v231
      %v233 = vmul.f32 %v225, 0.25
      %v234 = vmul.f32 %v232, 0.25
      %v237 = vrot.slane %v234, 4
      %v238 = vsel %vm218, %v233, %v237
      %v240 = vsub.f32 %v210, %v238
      %v241 = vmul.f32 %v240, %v240
      %243 = vst [vmem:[#allocation1] ss:$2 sm:$0xff] %v241
      %v244 = vld.sshfl [vmem:[#allocation1] sm:$0xff pattern:$0x75316420]
      %v245 = vld.sshfl [vmem:[#allocation1 + $0x8] sm:$0xff pattern:$0x75316420]
      %v248 = vsel %vm218, %v244, 0.0
      %v249 = vrot.slane %v248, 4
      %v250 = vadd.f32 %v248, %v249
      %v251 = vrot.slane %v250, 2
      %v252 = vadd.f32 %v250, %v251
      %v253 = vrot.slane %v252, 1
      %v254 = vadd.f32 %v252, %v253
      %v255 = vsel %vm218, %v245, 0.0
      %v256 = vrot.slane %v255, 4
      %v257 = vadd.f32 %v255, %v256
      %v258 = vrot.slane %v257, 2
      %v259 = vadd.f32 %v257, %v258
      %v260 = vrot.slane %v259, 1
      %v261 = vadd.f32 %v259, %v260
      %v262 = vmul.f32 %v254, 0.25
      %v263 = vmul.f32 %v261, 0.25
      %v264 = vadd.f32 %v262, 1e-05
      %v265 = vadd.f32 %v263, 1e-05
      %v266 = vrsqrt.pop %v264
      %v267 = vmul.f32 %v266, %v264
      %v268 = vmul.f32 %v267, %v266
      %v269 = vmul.f32 0.5, %v268
      %v270 = vsub.f32 1.5, %v269
      %v271 = vmul.f32 %v266, %v270
      %vm272 = vweird.f32 %v264
      %vm273 = vweird.f32 %v266
      %vm274 = vmor %vm272, %vm273
      %v275 = vsel %vm274, %v266, %v271
      %v276 = vrsqrt.pop %v265
      %v277 = vmul.f32 %v276, %v265
      %v278 = vmul.f32 %v277, %v276
      %v279 = vmul.f32 0.5, %v278
      %v280 = vsub.f32 1.5, %v279
      %v281 = vmul.f32 %v276, %v280
      %vm282 = vweird.f32 %v265
      %vm283 = vweird.f32 %v276
      %vm284 = vmor %vm282, %vm283
      %v285 = vsel %vm284, %v276, %v281
      %287 = vset.pattern.permute.xlu0 0
      %288 = vperm.xlu0 %287, %v211
      %v289 = vpop.permute.xlu0 %288
      %v291 = vmul.f32 %v275, %v289
      %v292 = vmul.f32 %v285, %v289
      %v295 = vrot.slane %v292, 4
      %v296 = vsel %vm218, %v291, %v295
      %v298 = vmul.f32 %v240, %v296
      %v299 = vld [vmem:[%s2] sm:$0xf]
      %301 = vset.pattern.permute.xlu0 0
      %302 = vperm.xlu0 %301, %v299
      %v303 = vpop.permute.xlu0 %302
      %v305 = vunpack.c.l.s4 839922192
      %v306 = vunpack.c.0.s8 %v305
      %v307 = vperm.slane %v303, %v306
      %v309 = vadd.f32 %v298, %v307
      %310 = vst [vmem:[%s208] sm:$0xff] %v309
      %s311 = smul.u32 2, %s19
      %p312 = scmp.lt.s32.totalorder %s18, 1
      %s313 = scalar_select %p312, %s18, 1
      %p314 = scmp.lt.s32.totalorder %s311, 1
      %s315 = scalar_select %p314, %s311, 1
      %s316 = smul.addr %s313, 2
      %s317 = sadd.s32 %s315, %s316
      %s318 = smul.addr %s317, 4
      %s319 = scalar_lea.vmem %s3, %s318
      // Predicated region
      $region33: #{layer_norm.1} parent=31 // pred_check
        %p320 = pneg %p116
      $region34: #{layer_norm.1} parent=31 // pred_check_branch
        %322 = sbr.rel (%p320) target = $region36
      $region35: #{layer_norm.1} parent=31 // pred_region
        %s323 = smul.u32 2, %s19
      $region36: #{layer_norm.1} parent=31 // pred_fallthru
        _
    $region32: #{layer_norm.1} parent=5 // pred_fallthru
      _
    %p324 = scmp.le.s32.totalorder 2, %s9
    // Predicated region
    $region37: #{layer_norm.1} parent=5 // pred_check
      %p325 = pneg %p324
    $region38: #{layer_norm.1} parent=5 // pred_check_branch
      %327 = sbr.rel (%p325) target = $region40
    $region39: #{layer_norm.1} parent=5 // pred_region
      %s328 = ssub.s32 %s9, 2
      // Predicated region
      $region41: #{layer_norm.1} parent=39 // pred_check
        %p329 = pneg %p122
      $region42: #{layer_norm.1} parent=39 // pred_check_branch
        %331 = sbr.rel (%p329) target = $region44
      $region43: #{layer_norm.1} parent=39 // pred_region
        %s332 = smul.u32 2, %s21
        %p333 = scmp.lt.s32.totalorder %s20, 1
        %s334 = scalar_select %p333, %s20, 1
        %p335 = scmp.lt.s32.totalorder %s332, 1
        %s336 = scalar_select %p335, %s332, 1
        %s337 = smul.addr %s334, 2
        %s338 = sadd.s32 %s336, %s337
        %s339 = smul.addr %s338, 4
        %s340 = scalar_lea.vmem %s3, %s339
      $region44: #{layer_norm.1} parent=39 // pred_fallthru
        _
    $region40: #{layer_norm.1} parent=5 // pred_fallthru
      _
  $region6: #{layer_norm.1} parent=0 // loop_footer
    %s13 = sadd.s32 1, %s9
  $region7: #{layer_norm.1} parent=0 // loop_footer_branch
    %8 = sbr.rel target = $region3
  $region8: #{layer_norm.1} parent=0 // loop_exit
    _

</llo_original>
